<compile_context>
chip_gen: v5e
topology: v5e:2x2
jax: 0.10.0
libtpu: 0.0.40
codegen_flags: <defaults>
</compile_context>

<pallas_src>
import functools

import jax
import jax.numpy as jnp
import numpy as np
from jax import lax
from jax.experimental import pallas as pl
from jax.experimental.pallas import tpu as pltpu  # noqa: F401  (TPU backend)


def _lstm_classifier_kernel(tok_ref, len_ref, emb_ref, wih_ref, whh_ref,
                            b_ref, wout_ref, bout_ref, out_ref,
                            *, seq_len, batch, emb, vocab):
    """tok_ref: (T*Bp, 1) int32 time-major token ids; weights pre-transposed."""
    T, Bp, E, V = seq_len, batch, emb, vocab

    # ---- fused embedding gather: one-hot (T*Bp, V) @ emb (V, E) on the MXU.
    tok = tok_ref[...]                                        # (T*Bp, 1) int32
    vocab_ids = lax.broadcasted_iota(jnp.int32, (T * Bp, V), 1)
    onehot = (tok == vocab_ids).astype(jnp.bfloat16)          # exact 0/1
    x_emb = jnp.dot(onehot, emb_ref[...],
                    preferred_element_type=jnp.float32)       # (T*Bp, E) f32

    # ---- hoisted input projection for all timesteps at once (+ fused bias).
    #      x_emb holds exact bf16 table values, so the bf16 cast is lossless.
    xw = (jnp.dot(x_emb.astype(jnp.bfloat16), wih_ref[...],
                  preferred_element_type=jnp.float32)
          + b_ref[...])                                       # (T*Bp, 4E) f32

    whh = whh_ref[...]                                        # (E, 4E) bf16
    lengths = len_ref[...]                                    # (Bp, 1) int32

    h = jnp.zeros((Bp, E), jnp.float32)
    c = jnp.zeros((Bp, E), jnp.float32)

    # ---- fully unrolled recurrence: only h @ W_hh on the serial path; each
    #      per-step slice of xw / gates is exactly one (8, 128) tile.
    for t in range(T):
        gates = xw[t * Bp:(t + 1) * Bp, :] + jnp.dot(
            h.astype(jnp.bfloat16), whh,
            preferred_element_type=jnp.float32)               # (Bp, 4E) f32
        s = jax.nn.sigmoid(gates)      # one full-width EUP pass
        th = jnp.tanh(gates)           # one full-width EUP pass
        i = s[:, 0 * E:1 * E]
        f = s[:, 1 * E:2 * E]
        g = th[:, 2 * E:3 * E]
        o = s[:, 3 * E:4 * E]
        c_new = f * c + i * g
        h_new = o * jnp.tanh(c_new)
        valid = t < lengths            # (Bp, 1): freeze state past seq length
        h = jnp.where(valid, h_new, h)
        c = jnp.where(valid, c_new, c)

    # ---- lane-dense (Bp, 128) output store (padded linear head).
    out_ref[...] = (jnp.dot(h.astype(jnp.bfloat16), wout_ref[...],
                            preferred_element_type=jnp.float32)
                    + bout_ref[...]).astype(out_ref.dtype)


def lstm_classifier(tokens, lengths, emb_table, w_ih, w_hh, bias, w_out, b_out):
    """tokens: (B, T) int32 ids; lengths: (B,) int32.

    w_ih, w_hh: (E, 4E) (PyTorch weights transposed), bias: (1, 4E) = b_ih+b_hh,
    w_out: (E, O), b_out: (1, O).
    """
    B, T = tokens.shape
    V, E = emb_table.shape
    O = w_out.shape[1]

    # Pad batch to the f32 sublane tile and output features to a full lane tile.
    Bp = ((max(B, 1) + 7) // 8) * 8
    Op = ((max(O, 1) + 127) // 128) * 128

    # Tiny int32 glue only.  Padded rows: in-range token id 0, length 0.
    tok_p = jnp.zeros((Bp, T), jnp.int32).at[:B, :].set(tokens.astype(jnp.int32))
    len_p = jnp.zeros((Bp, 1), jnp.int32).at[:B, 0].set(lengths.astype(jnp.int32))
    tok_tb = tok_p.T.reshape(T * Bp, 1)                       # time-major ids

    # Lane-dense padded linear head.
    w_out_p = jnp.zeros((E, Op), w_out.dtype).at[:, :O].set(w_out)
    b_out_p = jnp.zeros((1, Op), jnp.float32).at[:, :O].set(b_out.astype(jnp.float32))

    # bf16 for MXU operands only; biases / accumulation / gate math stay f32.
    emb_bf = emb_table.astype(jnp.bfloat16)
    wih_bf = w_ih.astype(jnp.bfloat16)
    whh_bf = w_hh.astype(jnp.bfloat16)
    wout_bf = w_out_p.astype(jnp.bfloat16)
    bias_f = bias.astype(jnp.float32)

    kernel = functools.partial(_lstm_classifier_kernel, seq_len=T, batch=Bp,
                               emb=E, vocab=V)
    full = lambda shape: pl.BlockSpec(shape, lambda: tuple(0 for _ in shape))

    out_p = pl.pallas_call(
        kernel,
        out_shape=jax.ShapeDtypeStruct((Bp, Op), jnp.float32),
        grid=(),
        in_specs=[
            full((T * Bp, 1)),     # token ids, time-major flattened
            full((Bp, 1)),         # lengths (padded rows = 0)
            full((V, E)),          # embedding table (bf16)
            full((E, 4 * E)),      # W_ih^T (bf16)
            full((E, 4 * E)),      # W_hh^T (bf16)
            full((1, 4 * E)),      # b_ih + b_hh (f32)
            full((E, Op)),         # linear weight^T, lane-padded (bf16)
            full((1, Op)),         # linear bias, lane-padded (f32)
        ],
        out_specs=full((Bp, Op)),
    )(tok_tb, len_p, emb_bf, wih_bf, whh_bf, bias_f, wout_bf, b_out_p)

    return out_p[:B, :O]


def reference_forward(tokens, lengths, emb_table, w_ih, w_hh, bias, w_out, b_out):
    """Pure-JAX f32 reference mirroring the PyTorch forward (packed LSTM)."""
    B, T = tokens.shape
    E = emb_table.shape[1]
    x = emb_table[tokens]                      # (B, T, E)
    h = jnp.zeros((B, E), jnp.float32)
    c = jnp.zeros((B, E), jnp.float32)
    for t in range(T):
        gates = x[:, t, :] @ w_ih + h @ w_hh + bias  # (B, 4E)
        i = jax.nn.sigmoid(gates[:, 0 * E:1 * E])
        f = jax.nn.sigmoid(gates[:, 1 * E:2 * E])
        g = jnp.tanh(gates[:, 2 * E:3 * E])
        o = jax.nn.sigmoid(gates[:, 3 * E:4 * E])
        c_new = f * c + i * g
        h_new = o * jnp.tanh(c_new)
        valid = (t < lengths)[:, None]
        h = jnp.where(valid, h_new, h)
        c = jnp.where(valid, c_new, c)
    return h @ w_out + b_out


if __name__ == "__main__":
    # Module hyper-parameters (small, consistent with the forward pass).
    num_words, emb_size, outputs = 50, 32, 4
    B, T = 2, 8

    key = jax.random.PRNGKey(0)
    keys = jax.random.split(key, 8)

    # Deterministic parameter init (PyTorch shapes, then transposed for kernel).
    emb_table = jax.random.normal(keys[0], (num_words, emb_size), jnp.float32) * 0.1
    w_ih_pt = jax.random.normal(keys[1], (4 * emb_size, emb_size), jnp.float32) * 0.1
    w_hh_pt = jax.random.normal(keys[2], (4 * emb_size, emb_size), jnp.float32) * 0.1
    b_ih = jax.random.normal(keys[3], (4 * emb_size,), jnp.float32) * 0.1
    b_hh = jax.random.normal(keys[4], (4 * emb_size,), jnp.float32) * 0.1
    w_lin_pt = jax.random.normal(keys[5], (outputs, emb_size), jnp.float32) * 0.1
    b_lin = jax.random.normal(keys[6], (outputs,), jnp.float32) * 0.1

    w_ih = w_ih_pt.T                       # (E, 4E)
    w_hh = w_hh_pt.T                       # (E, 4E)
    bias = (b_ih + b_hh).reshape(1, -1)    # (1, 4E)
    w_out = w_lin_pt.T                     # (E, O)
    b_out = b_lin.reshape(1, -1)           # (1, O)

    # Example inputs: token ids (B, T) and per-sequence lengths.
    tokens = jax.random.randint(keys[7], (B, T), 0, num_words, jnp.int32)
    lengths = jnp.array([T, 5], dtype=jnp.int32)

    # TODO(synk): dropout is defined in __init__ but unused in forward -> no-op.
    out = lstm_classifier(tokens, lengths, emb_table, w_ih, w_hh,
                          bias, w_out, b_out)
    out = jax.block_until_ready(out)

    ref = reference_forward(tokens, lengths, emb_table, w_ih, w_hh,
                            bias, w_out, b_out)
    assert out.shape == (B, outputs)
    # Tolerance loosened vs the pure-f32 reference because MXU operands are
    # cast to bf16 (accumulation stays f32); observed error is ~1e-3.
    np.testing.assert_allclose(np.asarray(out), np.asarray(ref),
                               rtol=2e-2, atol=2e-2)

    print("KERNEL_OK")
</pallas_src>

<mosaic_0001>
module attributes {stable_mosaic.version = 11 : i64} {
  func.func @_lstm_classifier_kernel(%arg0: memref<64x1xi32, #tpu.memory_space<vmem>>, %arg1: memref<8x1xi32, #tpu.memory_space<vmem>>, %arg2: memref<50x32xbf16, #tpu.memory_space<vmem>>, %arg3: memref<32x128xbf16, #tpu.memory_space<vmem>>, %arg4: memref<32x128xbf16, #tpu.memory_space<vmem>>, %arg5: memref<1x128xf32, #tpu.memory_space<vmem>>, %arg6: memref<32x128xbf16, #tpu.memory_space<vmem>>, %arg7: memref<1x128xf32, #tpu.memory_space<vmem>>, %arg8: memref<8x128xf32, #tpu.memory_space<vmem>>) attributes {dimension_semantics = [], scalar_prefetch = 0 : i64, scratch_operands = 0 : i64, tpu.core_type = #tpu.core_type<tc>} {
    %c0 = arith.constant 0 : index
    %c0_0 = arith.constant 0 : index
    %0 = vector.load %arg0[%c0, %c0_0] : memref<64x1xi32, #tpu.memory_space<vmem>>, vector<64x1xi32>
    %1 = tpu.iota {dimensions = array<i32: 1>} : vector<64x50xi32>
    %2 = vector.broadcast %0 : vector<64x1xi32> to vector<64x50xi32>
    %3 = arith.cmpi eq, %2, %1 : vector<64x50xi32>
    %4 = arith.extui %3 : vector<64x50xi1> to vector<64x50xi32>
    %5 = arith.sitofp %4 : vector<64x50xi32> to vector<64x50xf32>
    %6 = arith.truncf %5 : vector<64x50xf32> to vector<64x50xbf16>
    %c0_1 = arith.constant 0 : index
    %c0_2 = arith.constant 0 : index
    %7 = vector.load %arg2[%c0_1, %c0_2] : memref<50x32xbf16, #tpu.memory_space<vmem>>, vector<50x32xbf16>
    %cst = arith.constant dense<0.000000e+00> : vector<64x32xf32>
    %8 = tpu.matmul %6, %7, %cst {dimension_numbers = #tpu.dot_dimension_numbers<[1], [0], [0], [1], [0, 0, 1, 1], [], []>} : vector<64x50xbf16>, vector<50x32xbf16>, vector<64x32xf32> -> vector<64x32xf32>
    %9 = arith.truncf %8 : vector<64x32xf32> to vector<64x32xbf16>
    %c0_3 = arith.constant 0 : index
    %c0_4 = arith.constant 0 : index
    %10 = vector.load %arg3[%c0_3, %c0_4] : memref<32x128xbf16, #tpu.memory_space<vmem>>, vector<32x128xbf16>
    %cst_5 = arith.constant dense<0.000000e+00> : vector<64x128xf32>
    %11 = tpu.matmul %9, %10, %cst_5 {dimension_numbers = #tpu.dot_dimension_numbers<[1], [0], [0], [1], [0, 0, 1, 1], [], []>} : vector<64x32xbf16>, vector<32x128xbf16>, vector<64x128xf32> -> vector<64x128xf32>
    %c0_6 = arith.constant 0 : index
    %c0_7 = arith.constant 0 : index
    %12 = vector.load %arg5[%c0_6, %c0_7] : memref<1x128xf32, #tpu.memory_space<vmem>>, vector<1x128xf32>
    %13 = vector.broadcast %12 : vector<1x128xf32> to vector<64x128xf32>
    %14 = arith.addf %11, %13 : vector<64x128xf32>
    %c0_8 = arith.constant 0 : index
    %c0_9 = arith.constant 0 : index
    %15 = vector.load %arg4[%c0_8, %c0_9] : memref<32x128xbf16, #tpu.memory_space<vmem>>, vector<32x128xbf16>
    %c0_10 = arith.constant 0 : index
    %c0_11 = arith.constant 0 : index
    %16 = vector.load %arg1[%c0_10, %c0_11] : memref<8x1xi32, #tpu.memory_space<vmem>>, vector<8x1xi32>
    %cst_12 = arith.constant 0.000000e+00 : f32
    %17 = vector.broadcast %cst_12 : f32 to vector<8x32xf32>
    %cst_13 = arith.constant 0.000000e+00 : f32
    %18 = vector.broadcast %cst_13 : f32 to vector<8x32xf32>
    %19 = vector.extract_strided_slice %14 {offsets = [0, 0], sizes = [8, 128], strides = [1, 1]} : vector<64x128xf32> to vector<8x128xf32>
    %20 = arith.truncf %17 : vector<8x32xf32> to vector<8x32xbf16>
    %cst_14 = arith.constant dense<0.000000e+00> : vector<8x128xf32>
    %21 = tpu.matmul %20, %15, %cst_14 {dimension_numbers = #tpu.dot_dimension_numbers<[1], [0], [0], [1], [0, 0, 1, 1], [], []>} : vector<8x32xbf16>, vector<32x128xbf16>, vector<8x128xf32> -> vector<8x128xf32>
    %22 = arith.addf %19, %21 : vector<8x128xf32>
    %23 = arith.negf %22 : vector<8x128xf32>
    %24 = math.exp %23 : vector<8x128xf32>
    %cst_15 = arith.constant 1.000000e+00 : f32
    %25 = vector.broadcast %cst_15 : f32 to vector<8x128xf32>
    %26 = arith.addf %25, %24 : vector<8x128xf32>
    %27 = arith.divf %25, %26 : vector<8x128xf32>
    %28 = math.tanh %22 : vector<8x128xf32>
    %29 = vector.extract_strided_slice %27 {offsets = [0, 0], sizes = [8, 32], strides = [1, 1]} : vector<8x128xf32> to vector<8x32xf32>
    %30 = vector.extract_strided_slice %27 {offsets = [0, 32], sizes = [8, 32], strides = [1, 1]} : vector<8x128xf32> to vector<8x32xf32>
    %31 = vector.extract_strided_slice %28 {offsets = [0, 64], sizes = [8, 32], strides = [1, 1]} : vector<8x128xf32> to vector<8x32xf32>
    %32 = vector.extract_strided_slice %27 {offsets = [0, 96], sizes = [8, 32], strides = [1, 1]} : vector<8x128xf32> to vector<8x32xf32>
    %33 = arith.mulf %30, %18 : vector<8x32xf32>
    %34 = arith.mulf %29, %31 : vector<8x32xf32>
    %35 = arith.addf %33, %34 : vector<8x32xf32>
    %36 = math.tanh %35 : vector<8x32xf32>
    %37 = arith.mulf %32, %36 : vector<8x32xf32>
    %c0_i32 = arith.constant 0 : i32
    %38 = vector.broadcast %c0_i32 : i32 to vector<8x1xi32>
    %39 = arith.cmpi sgt, %16, %38 : vector<8x1xi32>
    %40 = vector.shape_cast %39 : vector<8x1xi1> to vector<8x1xi1>
    %41 = vector.broadcast %40 : vector<8x1xi1> to vector<8x32xi1>
    %42 = arith.select %41, %37, %17 : vector<8x32xi1>, vector<8x32xf32>
    %43 = vector.shape_cast %39 : vector<8x1xi1> to vector<8x1xi1>
    %44 = vector.broadcast %43 : vector<8x1xi1> to vector<8x32xi1>
    %45 = arith.select %44, %35, %18 : vector<8x32xi1>, vector<8x32xf32>
    %46 = vector.extract_strided_slice %14 {offsets = [8, 0], sizes = [8, 128], strides = [1, 1]} : vector<64x128xf32> to vector<8x128xf32>
    %47 = arith.truncf %42 : vector<8x32xf32> to vector<8x32xbf16>
    %cst_16 = arith.constant dense<0.000000e+00> : vector<8x128xf32>
    %48 = tpu.matmul %47, %15, %cst_16 {dimension_numbers = #tpu.dot_dimension_numbers<[1], [0], [0], [1], [0, 0, 1, 1], [], []>} : vector<8x32xbf16>, vector<32x128xbf16>, vector<8x128xf32> -> vector<8x128xf32>
    %49 = arith.addf %46, %48 : vector<8x128xf32>
    %50 = arith.negf %49 : vector<8x128xf32>
    %51 = math.exp %50 : vector<8x128xf32>
    %cst_17 = arith.constant 1.000000e+00 : f32
    %52 = vector.broadcast %cst_17 : f32 to vector<8x128xf32>
    %53 = arith.addf %52, %51 : vector<8x128xf32>
    %54 = arith.divf %52, %53 : vector<8x128xf32>
    %55 = math.tanh %49 : vector<8x128xf32>
    %56 = vector.extract_strided_slice %54 {offsets = [0, 0], sizes = [8, 32], strides = [1, 1]} : vector<8x128xf32> to vector<8x32xf32>
    %57 = vector.extract_strided_slice %54 {offsets = [0, 32], sizes = [8, 32], strides = [1, 1]} : vector<8x128xf32> to vector<8x32xf32>
    %58 = vector.extract_strided_slice %55 {offsets = [0, 64], sizes = [8, 32], strides = [1, 1]} : vector<8x128xf32> to vector<8x32xf32>
    %59 = vector.extract_strided_slice %54 {offsets = [0, 96], sizes = [8, 32], strides = [1, 1]} : vector<8x128xf32> to vector<8x32xf32>
    %60 = arith.mulf %57, %45 : vector<8x32xf32>
    %61 = arith.mulf %56, %58 : vector<8x32xf32>
    %62 = arith.addf %60, %61 : vector<8x32xf32>
    %63 = math.tanh %62 : vector<8x32xf32>
    %64 = arith.mulf %59, %63 : vector<8x32xf32>
    %c1_i32 = arith.constant 1 : i32
    %65 = vector.broadcast %c1_i32 : i32 to vector<8x1xi32>
    %66 = arith.cmpi sgt, %16, %65 : vector<8x1xi32>
    %67 = vector.shape_cast %66 : vector<8x1xi1> to vector<8x1xi1>
    %68 = vector.broadcast %67 : vector<8x1xi1> to vector<8x32xi1>
    %69 = arith.select %68, %64, %42 : vector<8x32xi1>, vector<8x32xf32>
    %70 = vector.shape_cast %66 : vector<8x1xi1> to vector<8x1xi1>
    %71 = vector.broadcast %70 : vector<8x1xi1> to vector<8x32xi1>
    %72 = arith.select %71, %62, %45 : vector<8x32xi1>, vector<8x32xf32>
    %73 = vector.extract_strided_slice %14 {offsets = [16, 0], sizes = [8, 128], strides = [1, 1]} : vector<64x128xf32> to vector<8x128xf32>
    %74 = arith.truncf %69 : vector<8x32xf32> to vector<8x32xbf16>
    %cst_18 = arith.constant dense<0.000000e+00> : vector<8x128xf32>
    %75 = tpu.matmul %74, %15, %cst_18 {dimension_numbers = #tpu.dot_dimension_numbers<[1], [0], [0], [1], [0, 0, 1, 1], [], []>} : vector<8x32xbf16>, vector<32x128xbf16>, vector<8x128xf32> -> vector<8x128xf32>
    %76 = arith.addf %73, %75 : vector<8x128xf32>
    %77 = arith.negf %76 : vector<8x128xf32>
    %78 = math.exp %77 : vector<8x128xf32>
    %cst_19 = arith.constant 1.000000e+00 : f32
    %79 = vector.broadcast %cst_19 : f32 to vector<8x128xf32>
    %80 = arith.addf %79, %78 : vector<8x128xf32>
    %81 = arith.divf %79, %80 : vector<8x128xf32>
    %82 = math.tanh %76 : vector<8x128xf32>
    %83 = vector.extract_strided_slice %81 {offsets = [0, 0], sizes = [8, 32], strides = [1, 1]} : vector<8x128xf32> to vector<8x32xf32>
    %84 = vector.extract_strided_slice %81 {offsets = [0, 32], sizes = [8, 32], strides = [1, 1]} : vector<8x128xf32> to vector<8x32xf32>
    %85 = vector.extract_strided_slice %82 {offsets = [0, 64], sizes = [8, 32], strides = [1, 1]} : vector<8x128xf32> to vector<8x32xf32>
    %86 = vector.extract_strided_slice %81 {offsets = [0, 96], sizes = [8, 32], strides = [1, 1]} : vector<8x128xf32> to vector<8x32xf32>
    %87 = arith.mulf %84, %72 : vector<8x32xf32>
    %88 = arith.mulf %83, %85 : vector<8x32xf32>
    %89 = arith.addf %87, %88 : vector<8x32xf32>
    %90 = math.tanh %89 : vector<8x32xf32>
    %91 = arith.mulf %86, %90 : vector<8x32xf32>
    %c2_i32 = arith.constant 2 : i32
    %92 = vector.broadcast %c2_i32 : i32 to vector<8x1xi32>
    %93 = arith.cmpi sgt, %16, %92 : vector<8x1xi32>
    %94 = vector.shape_cast %93 : vector<8x1xi1> to vector<8x1xi1>
    %95 = vector.broadcast %94 : vector<8x1xi1> to vector<8x32xi1>
    %96 = arith.select %95, %91, %69 : vector<8x32xi1>, vector<8x32xf32>
    %97 = vector.shape_cast %93 : vector<8x1xi1> to vector<8x1xi1>
    %98 = vector.broadcast %97 : vector<8x1xi1> to vector<8x32xi1>
    %99 = arith.select %98, %89, %72 : vector<8x32xi1>, vector<8x32xf32>
    %100 = vector.extract_strided_slice %14 {offsets = [24, 0], sizes = [8, 128], strides = [1, 1]} : vector<64x128xf32> to vector<8x128xf32>
    %101 = arith.truncf %96 : vector<8x32xf32> to vector<8x32xbf16>
    %cst_20 = arith.constant dense<0.000000e+00> : vector<8x128xf32>
    %102 = tpu.matmul %101, %15, %cst_20 {dimension_numbers = #tpu.dot_dimension_numbers<[1], [0], [0], [1], [0, 0, 1, 1], [], []>} : vector<8x32xbf16>, vector<32x128xbf16>, vector<8x128xf32> -> vector<8x128xf32>
    %103 = arith.addf %100, %102 : vector<8x128xf32>
    %104 = arith.negf %103 : vector<8x128xf32>
    %105 = math.exp %104 : vector<8x128xf32>
    %cst_21 = arith.constant 1.000000e+00 : f32
    %106 = vector.broadcast %cst_21 : f32 to vector<8x128xf32>
    %107 = arith.addf %106, %105 : vector<8x128xf32>
    %108 = arith.divf %106, %107 : vector<8x128xf32>
    %109 = math.tanh %103 : vector<8x128xf32>
    %110 = vector.extract_strided_slice %108 {offsets = [0, 0], sizes = [8, 32], strides = [1, 1]} : vector<8x128xf32> to vector<8x32xf32>
    %111 = vector.extract_strided_slice %108 {offsets = [0, 32], sizes = [8, 32], strides = [1, 1]} : vector<8x128xf32> to vector<8x32xf32>
    %112 = vector.extract_strided_slice %109 {offsets = [0, 64], sizes = [8, 32], strides = [1, 1]} : vector<8x128xf32> to vector<8x32xf32>
    %113 = vector.extract_strided_slice %108 {offsets = [0, 96], sizes = [8, 32], strides = [1, 1]} : vector<8x128xf32> to vector<8x32xf32>
    %114 = arith.mulf %111, %99 : vector<8x32xf32>
    %115 = arith.mulf %110, %112 : vector<8x32xf32>
    %116 = arith.addf %114, %115 : vector<8x32xf32>
    %117 = math.tanh %116 : vector<8x32xf32>
    %118 = arith.mulf %113, %117 : vector<8x32xf32>
    %c3_i32 = arith.constant 3 : i32
    %119 = vector.broadcast %c3_i32 : i32 to vector<8x1xi32>
    %120 = arith.cmpi sgt, %16, %119 : vector<8x1xi32>
    %121 = vector.shape_cast %120 : vector<8x1xi1> to vector<8x1xi1>
    %122 = vector.broadcast %121 : vector<8x1xi1> to vector<8x32xi1>
    %123 = arith.select %122, %118, %96 : vector<8x32xi1>, vector<8x32xf32>
    %124 = vector.shape_cast %120 : vector<8x1xi1> to vector<8x1xi1>
    %125 = vector.broadcast %124 : vector<8x1xi1> to vector<8x32xi1>
    %126 = arith.select %125, %116, %99 : vector<8x32xi1>, vector<8x32xf32>
    %127 = vector.extract_strided_slice %14 {offsets = [32, 0], sizes = [8, 128], strides = [1, 1]} : vector<64x128xf32> to vector<8x128xf32>
    %128 = arith.truncf %123 : vector<8x32xf32> to vector<8x32xbf16>
    %cst_22 = arith.constant dense<0.000000e+00> : vector<8x128xf32>
    %129 = tpu.matmul %128, %15, %cst_22 {dimension_numbers = #tpu.dot_dimension_numbers<[1], [0], [0], [1], [0, 0, 1, 1], [], []>} : vector<8x32xbf16>, vector<32x128xbf16>, vector<8x128xf32> -> vector<8x128xf32>
    %130 = arith.addf %127, %129 : vector<8x128xf32>
    %131 = arith.negf %130 : vector<8x128xf32>
    %132 = math.exp %131 : vector<8x128xf32>
    %cst_23 = arith.constant 1.000000e+00 : f32
    %133 = vector.broadcast %cst_23 : f32 to vector<8x128xf32>
    %134 = arith.addf %133, %132 : vector<8x128xf32>
    %135 = arith.divf %133, %134 : vector<8x128xf32>
    %136 = math.tanh %130 : vector<8x128xf32>
    %137 = vector.extract_strided_slice %135 {offsets = [0, 0], sizes = [8, 32], strides = [1, 1]} : vector<8x128xf32> to vector<8x32xf32>
    %138 = vector.extract_strided_slice %135 {offsets = [0, 32], sizes = [8, 32], strides = [1, 1]} : vector<8x128xf32> to vector<8x32xf32>
    %139 = vector.extract_strided_slice %136 {offsets = [0, 64], sizes = [8, 32], strides = [1, 1]} : vector<8x128xf32> to vector<8x32xf32>
    %140 = vector.extract_strided_slice %135 {offsets = [0, 96], sizes = [8, 32], strides = [1, 1]} : vector<8x128xf32> to vector<8x32xf32>
    %141 = arith.mulf %138, %126 : vector<8x32xf32>
    %142 = arith.mulf %137, %139 : vector<8x32xf32>
    %143 = arith.addf %141, %142 : vector<8x32xf32>
    %144 = math.tanh %143 : vector<8x32xf32>
    %145 = arith.mulf %140, %144 : vector<8x32xf32>
    %c4_i32 = arith.constant 4 : i32
    %146 = vector.broadcast %c4_i32 : i32 to vector<8x1xi32>
    %147 = arith.cmpi sgt, %16, %146 : vector<8x1xi32>
    %148 = vector.shape_cast %147 : vector<8x1xi1> to vector<8x1xi1>
    %149 = vector.broadcast %148 : vector<8x1xi1> to vector<8x32xi1>
    %150 = arith.select %149, %145, %123 : vector<8x32xi1>, vector<8x32xf32>
    %151 = vector.shape_cast %147 : vector<8x1xi1> to vector<8x1xi1>
    %152 = vector.broadcast %151 : vector<8x1xi1> to vector<8x32xi1>
    %153 = arith.select %152, %143, %126 : vector<8x32xi1>, vector<8x32xf32>
    %154 = vector.extract_strided_slice %14 {offsets = [40, 0], sizes = [8, 128], strides = [1, 1]} : vector<64x128xf32> to vector<8x128xf32>
    %155 = arith.truncf %150 : vector<8x32xf32> to vector<8x32xbf16>
    %cst_24 = arith.constant dense<0.000000e+00> : vector<8x128xf32>
    %156 = tpu.matmul %155, %15, %cst_24 {dimension_numbers = #tpu.dot_dimension_numbers<[1], [0], [0], [1], [0, 0, 1, 1], [], []>} : vector<8x32xbf16>, vector<32x128xbf16>, vector<8x128xf32> -> vector<8x128xf32>
    %157 = arith.addf %154, %156 : vector<8x128xf32>
    %158 = arith.negf %157 : vector<8x128xf32>
    %159 = math.exp %158 : vector<8x128xf32>
    %cst_25 = arith.constant 1.000000e+00 : f32
    %160 = vector.broadcast %cst_25 : f32 to vector<8x128xf32>
    %161 = arith.addf %160, %159 : vector<8x128xf32>
    %162 = arith.divf %160, %161 : vector<8x128xf32>
    %163 = math.tanh %157 : vector<8x128xf32>
    %164 = vector.extract_strided_slice %162 {offsets = [0, 0], sizes = [8, 32], strides = [1, 1]} : vector<8x128xf32> to vector<8x32xf32>
    %165 = vector.extract_strided_slice %162 {offsets = [0, 32], sizes = [8, 32], strides = [1, 1]} : vector<8x128xf32> to vector<8x32xf32>
    %166 = vector.extract_strided_slice %163 {offsets = [0, 64], sizes = [8, 32], strides = [1, 1]} : vector<8x128xf32> to vector<8x32xf32>
    %167 = vector.extract_strided_slice %162 {offsets = [0, 96], sizes = [8, 32], strides = [1, 1]} : vector<8x128xf32> to vector<8x32xf32>
    %168 = arith.mulf %165, %153 : vector<8x32xf32>
    %169 = arith.mulf %164, %166 : vector<8x32xf32>
    %170 = arith.addf %168, %169 : vector<8x32xf32>
    %171 = math.tanh %170 : vector<8x32xf32>
    %172 = arith.mulf %167, %171 : vector<8x32xf32>
    %c5_i32 = arith.constant 5 : i32
    %173 = vector.broadcast %c5_i32 : i32 to vector<8x1xi32>
    %174 = arith.cmpi sgt, %16, %173 : vector<8x1xi32>
    %175 = vector.shape_cast %174 : vector<8x1xi1> to vector<8x1xi1>
    %176 = vector.broadcast %175 : vector<8x1xi1> to vector<8x32xi1>
    %177 = arith.select %176, %172, %150 : vector<8x32xi1>, vector<8x32xf32>
    %178 = vector.shape_cast %174 : vector<8x1xi1> to vector<8x1xi1>
    %179 = vector.broadcast %178 : vector<8x1xi1> to vector<8x32xi1>
    %180 = arith.select %179, %170, %153 : vector<8x32xi1>, vector<8x32xf32>
    %181 = vector.extract_strided_slice %14 {offsets = [48, 0], sizes = [8, 128], strides = [1, 1]} : vector<64x128xf32> to vector<8x128xf32>
    %182 = arith.truncf %177 : vector<8x32xf32> to vector<8x32xbf16>
    %cst_26 = arith.constant dense<0.000000e+00> : vector<8x128xf32>
    %183 = tpu.matmul %182, %15, %cst_26 {dimension_numbers = #tpu.dot_dimension_numbers<[1], [0], [0], [1], [0, 0, 1, 1], [], []>} : vector<8x32xbf16>, vector<32x128xbf16>, vector<8x128xf32> -> vector<8x128xf32>
    %184 = arith.addf %181, %183 : vector<8x128xf32>
    %185 = arith.negf %184 : vector<8x128xf32>
    %186 = math.exp %185 : vector<8x128xf32>
    %cst_27 = arith.constant 1.000000e+00 : f32
    %187 = vector.broadcast %cst_27 : f32 to vector<8x128xf32>
    %188 = arith.addf %187, %186 : vector<8x128xf32>
    %189 = arith.divf %187, %188 : vector<8x128xf32>
    %190 = math.tanh %184 : vector<8x128xf32>
    %191 = vector.extract_strided_slice %189 {offsets = [0, 0], sizes = [8, 32], strides = [1, 1]} : vector<8x128xf32> to vector<8x32xf32>
    %192 = vector.extract_strided_slice %189 {offsets = [0, 32], sizes = [8, 32], strides = [1, 1]} : vector<8x128xf32> to vector<8x32xf32>
    %193 = vector.extract_strided_slice %190 {offsets = [0, 64], sizes = [8, 32], strides = [1, 1]} : vector<8x128xf32> to vector<8x32xf32>
    %194 = vector.extract_strided_slice %189 {offsets = [0, 96], sizes = [8, 32], strides = [1, 1]} : vector<8x128xf32> to vector<8x32xf32>
    %195 = arith.mulf %192, %180 : vector<8x32xf32>
    %196 = arith.mulf %191, %193 : vector<8x32xf32>
    %197 = arith.addf %195, %196 : vector<8x32xf32>
    %198 = math.tanh %197 : vector<8x32xf32>
    %199 = arith.mulf %194, %198 : vector<8x32xf32>
    %c6_i32 = arith.constant 6 : i32
    %200 = vector.broadcast %c6_i32 : i32 to vector<8x1xi32>
    %201 = arith.cmpi sgt, %16, %200 : vector<8x1xi32>
    %202 = vector.shape_cast %201 : vector<8x1xi1> to vector<8x1xi1>
    %203 = vector.broadcast %202 : vector<8x1xi1> to vector<8x32xi1>
    %204 = arith.select %203, %199, %177 : vector<8x32xi1>, vector<8x32xf32>
    %205 = vector.shape_cast %201 : vector<8x1xi1> to vector<8x1xi1>
    %206 = vector.broadcast %205 : vector<8x1xi1> to vector<8x32xi1>
    %207 = arith.select %206, %197, %180 : vector<8x32xi1>, vector<8x32xf32>
    %208 = vector.extract_strided_slice %14 {offsets = [56, 0], sizes = [8, 128], strides = [1, 1]} : vector<64x128xf32> to vector<8x128xf32>
    %209 = arith.truncf %204 : vector<8x32xf32> to vector<8x32xbf16>
    %cst_28 = arith.constant dense<0.000000e+00> : vector<8x128xf32>
    %210 = tpu.matmul %209, %15, %cst_28 {dimension_numbers = #tpu.dot_dimension_numbers<[1], [0], [0], [1], [0, 0, 1, 1], [], []>} : vector<8x32xbf16>, vector<32x128xbf16>, vector<8x128xf32> -> vector<8x128xf32>
    %211 = arith.addf %208, %210 : vector<8x128xf32>
    %212 = arith.negf %211 : vector<8x128xf32>
    %213 = math.exp %212 : vector<8x128xf32>
    %cst_29 = arith.constant 1.000000e+00 : f32
    %214 = vector.broadcast %cst_29 : f32 to vector<8x128xf32>
    %215 = arith.addf %214, %213 : vector<8x128xf32>
    %216 = arith.divf %214, %215 : vector<8x128xf32>
    %217 = math.tanh %211 : vector<8x128xf32>
    %218 = vector.extract_strided_slice %216 {offsets = [0, 0], sizes = [8, 32], strides = [1, 1]} : vector<8x128xf32> to vector<8x32xf32>
    %219 = vector.extract_strided_slice %216 {offsets = [0, 32], sizes = [8, 32], strides = [1, 1]} : vector<8x128xf32> to vector<8x32xf32>
    %220 = vector.extract_strided_slice %217 {offsets = [0, 64], sizes = [8, 32], strides = [1, 1]} : vector<8x128xf32> to vector<8x32xf32>
    %221 = vector.extract_strided_slice %216 {offsets = [0, 96], sizes = [8, 32], strides = [1, 1]} : vector<8x128xf32> to vector<8x32xf32>
    %222 = arith.mulf %219, %207 : vector<8x32xf32>
    %223 = arith.mulf %218, %220 : vector<8x32xf32>
    %224 = arith.addf %222, %223 : vector<8x32xf32>
    %225 = math.tanh %224 : vector<8x32xf32>
    %226 = arith.mulf %221, %225 : vector<8x32xf32>
    %c7_i32 = arith.constant 7 : i32
    %227 = vector.broadcast %c7_i32 : i32 to vector<8x1xi32>
    %228 = arith.cmpi sgt, %16, %227 : vector<8x1xi32>
    %229 = vector.shape_cast %228 : vector<8x1xi1> to vector<8x1xi1>
    %230 = vector.broadcast %229 : vector<8x1xi1> to vector<8x32xi1>
    %231 = arith.select %230, %226, %204 : vector<8x32xi1>, vector<8x32xf32>
    %232 = arith.truncf %231 : vector<8x32xf32> to vector<8x32xbf16>
    %c0_30 = arith.constant 0 : index
    %c0_31 = arith.constant 0 : index
    %233 = vector.load %arg6[%c0_30, %c0_31] : memref<32x128xbf16, #tpu.memory_space<vmem>>, vector<32x128xbf16>
    %cst_32 = arith.constant dense<0.000000e+00> : vector<8x128xf32>
    %234 = tpu.matmul %232, %233, %cst_32 {dimension_numbers = #tpu.dot_dimension_numbers<[1], [0], [0], [1], [0, 0, 1, 1], [], []>} : vector<8x32xbf16>, vector<32x128xbf16>, vector<8x128xf32> -> vector<8x128xf32>
    %c0_33 = arith.constant 0 : index
    %c0_34 = arith.constant 0 : index
    %235 = vector.load %arg7[%c0_33, %c0_34] : memref<1x128xf32, #tpu.memory_space<vmem>>, vector<1x128xf32>
    %236 = vector.broadcast %235 : vector<1x128xf32> to vector<8x128xf32>
    %237 = arith.addf %234, %236 : vector<8x128xf32>
    %c0_35 = arith.constant 0 : index
    %c0_36 = arith.constant 0 : index
    %238 = vector.load %arg8[%c0_35, %c0_36] : memref<8x128xf32, #tpu.memory_space<vmem>>, vector<8x128xf32>
    tpu.vector_store %arg8[%c0_35, %c0_36], %237 {strides = array<i32>} : memref<8x128xf32, #tpu.memory_space<vmem>>, vector<8x128xf32>,
    return
  }
}

</mosaic_0001>

<llo_original>
// kernel: tpu_custom_call.1
$region0: #{tpu_custom_call.1}
  #allocation0 [shape = 'u32[]', space=smem, size = 0x4, offset = 0x4, fixed_abs, tag = 'smem constant byte address 0x4 - core index']
  #allocation1 [shape = 'u32[72,128]{1,0:T(1,128)}', space=vmem, size = 0x9000, scoped, tag = 'internal scratch']
  %s0 = inlined_call_operand.vmem [shape: s32[64,1], index: 0, kind: input, shape index: {}]
  %s1 = inlined_call_operand.vmem [shape: s32[8,1], index: 1, kind: input, shape index: {}]
  %s2 = inlined_call_operand.vmem [shape: bf16[50,32], index: 2, kind: input, shape index: {}]
  %s3 = inlined_call_operand.vmem [shape: bf16[32,128], index: 3, kind: input, shape index: {}]
  %s4 = inlined_call_operand.vmem [shape: bf16[32,128], index: 4, kind: input, shape index: {}]
  %s5 = inlined_call_operand.vmem [shape: f32[1,128], index: 5, kind: input, shape index: {}]
  %s6 = inlined_call_operand.vmem [shape: bf16[32,128], index: 6, kind: input, shape index: {}]
  %s7 = inlined_call_operand.vmem [shape: f32[1,128], index: 7, kind: input, shape index: {}]
  %s8 = inlined_call_operand.hbm [shape: f32[8,128], index: 8, kind: output, shape index: {}]
  %s9 = sld [smem:[#allocation0]]
  $region42: #{tpu_custom_call.1} parent=0
    _
  %s11 = ssub.s32 1, %s9
  %s12 = scalar_select 0, %s11, %s9
  $region1: #{tpu_custom_call.1} parent=0
    #allocation2 [shape = 'u8[4096]{0}', space=vmem, size = 0x1000, scoped, tag = 'output window, operand 0, single buffered']
    #allocation3 [shape = 's32[1]{0}', space=sflag, size = 0x4, scoped, tag = 'scoped memory for tpu_custom_call.1']
    %13 = vsyncpa [#allocation3], 0
    // Predicated region
    $region2: #{tpu_custom_call.1} parent=1 // pred_check
      _
    $region3: #{tpu_custom_call.1} parent=1 // pred_check_branch
      %15 = sbr.rel (0) target = $region5
    $region4: #{tpu_custom_call.1} parent=1 // pred_region
      _
    $region5: #{tpu_custom_call.1} parent=1 // pred_fallthru
      _
    // Predicated region
    $region6: #{tpu_custom_call.1} parent=1 // pred_check
      _
    $region7: #{tpu_custom_call.1} parent=1 // pred_check_branch
      %17 = sbr.rel (0) target = $region9
    $region8: #{tpu_custom_call.1} parent=1 // pred_region
      _
    $region9: #{tpu_custom_call.1} parent=1 // pred_fallthru
      _
    // Predicated region
    $region10: #{tpu_custom_call.1} parent=1 // pred_check
      _
    $region11: #{tpu_custom_call.1} parent=1 // pred_check_branch
      %19 = sbr.rel (0) target = $region13
    $region12: #{tpu_custom_call.1} parent=1 // pred_region
      _
    $region13: #{tpu_custom_call.1} parent=1 // pred_fallthru
      _
    // Predicated region
    $region14: #{tpu_custom_call.1} parent=1 // pred_check
      _
    $region15: #{tpu_custom_call.1} parent=1 // pred_check_branch
      %21 = sbr.rel (0) target = $region17
    $region16: #{tpu_custom_call.1} parent=1 // pred_region
      _
    $region17: #{tpu_custom_call.1} parent=1 // pred_fallthru
      _
    // Predicated region
    $region18: #{tpu_custom_call.1} parent=1 // pred_check
      _
    $region19: #{tpu_custom_call.1} parent=1 // pred_check_branch
      %23 = sbr.rel (0) target = $region21
    $region20: #{tpu_custom_call.1} parent=1 // pred_region
      _
    $region21: #{tpu_custom_call.1} parent=1 // pred_fallthru
      _
    // Predicated region
    $region22: #{tpu_custom_call.1} parent=1 // pred_check
      _
    $region23: #{tpu_custom_call.1} parent=1 // pred_check_branch
      %25 = sbr.rel (0) target = $region25
    $region24: #{tpu_custom_call.1} parent=1 // pred_region
      _
    $region25: #{tpu_custom_call.1} parent=1 // pred_fallthru
      _
    // Predicated region
    $region26: #{tpu_custom_call.1} parent=1 // pred_check
      _
    $region27: #{tpu_custom_call.1} parent=1 // pred_check_branch
      %27 = sbr.rel (0) target = $region29
    $region28: #{tpu_custom_call.1} parent=1 // pred_region
      _
    $region29: #{tpu_custom_call.1} parent=1 // pred_fallthru
      _
    // Predicated region
    $region30: #{tpu_custom_call.1} parent=1 // pred_check
      _
    $region31: #{tpu_custom_call.1} parent=1 // pred_check_branch
      %29 = sbr.rel (0) target = $region33
    $region32: #{tpu_custom_call.1} parent=1 // pred_region
      _
    $region33: #{tpu_custom_call.1} parent=1 // pred_fallthru
      _
    %v31 = vld [vmem:[%s0] sm:$0xff]
    %v32 = vld [vmem:[%s0 + $0x8] sm:$0xff]
    %v33 = vld [vmem:[%s0 + $0x10] sm:$0xff]
    %v34 = vld [vmem:[%s0 + $0x18] sm:$0xff]
    %v35 = vld [vmem:[%s0 + $0x20] sm:$0xff]
    %v36 = vld [vmem:[%s0 + $0x28] sm:$0xff]
    %v37 = vld [vmem:[%s0 + $0x30] sm:$0xff]
    %v38 = vld [vmem:[%s0 + $0x38] sm:$0xff]
    %v39 = vlaneseq
    %v40 = vand.u32 %v39, 127
    %41 = vset.pattern.permute.xlu0 0
    %42 = vperm.xlu0 %41, %v31
    %v43 = vpop.permute.xlu0 %42
    %44 = vset.pattern.permute.xlu0 0
    %45 = vperm.xlu0 %44, %v32
    %v46 = vpop.permute.xlu0 %45
    %47 = vset.pattern.permute.xlu0 0
    %48 = vperm.xlu0 %47, %v33
    %v49 = vpop.permute.xlu0 %48
    %50 = vset.pattern.permute.xlu0 0
    %51 = vperm.xlu0 %50, %v34
    %v52 = vpop.permute.xlu0 %51
    %53 = vset.pattern.permute.xlu0 0
    %54 = vperm.xlu0 %53, %v35
    %v55 = vpop.permute.xlu0 %54
    %56 = vset.pattern.permute.xlu0 0
    %57 = vperm.xlu0 %56, %v36
    %v58 = vpop.permute.xlu0 %57
    %59 = vset.pattern.permute.xlu0 0
    %60 = vperm.xlu0 %59, %v37
    %v61 = vpop.permute.xlu0 %60
    %62 = vset.pattern.permute.xlu0 0
    %63 = vperm.xlu0 %62, %v38
    %v64 = vpop.permute.xlu0 %63
    %vm65 = vcmp.eq.s32.totalorder %v43, %v40
    %vm66 = vcmp.eq.s32.totalorder %v46, %v40
    %vm67 = vcmp.eq.s32.totalorder %v49, %v40
    %vm68 = vcmp.eq.s32.totalorder %v52, %v40
    %vm69 = vcmp.eq.s32.totalorder %v55, %v40
    %vm70 = vcmp.eq.s32.totalorder %v58, %v40
    %vm71 = vcmp.eq.s32.totalorder %v61, %v40
    %vm72 = vcmp.eq.s32.totalorder %v64, %v40
    %v73 = vsel %vm65, 1, 0
    %v74 = vsel %vm66, 1, 0
    %v75 = vsel %vm67, 1, 0
    %v76 = vsel %vm68, 1, 0
    %v77 = vsel %vm69, 1, 0
    %v78 = vsel %vm70, 1, 0
    %v79 = vsel %vm71, 1, 0
    %v80 = vsel %vm72, 1, 0
    %v81 = vcvt.s32.f32 %v73
    %v82 = vcvt.s32.f32 %v74
    %v83 = vcvt.s32.f32 %v75
    %v84 = vcvt.s32.f32 %v76
    %v85 = vcvt.s32.f32 %v77
    %v86 = vcvt.s32.f32 %v78
    %v87 = vcvt.s32.f32 %v79
    %v88 = vcvt.s32.f32 %v80
    %v89 = vpack.c.bf16 %v82, %v81
    %v90 = vpack.c.bf16 %v84, %v83
    %v91 = vpack.c.bf16 %v86, %v85
    %v92 = vpack.c.bf16 %v88, %v87
    %v93 = vld [vmem:[%s2] sm:$0xf]
    %v94 = vld [vmem:[%s2 + $0x4] sm:$0xf]
    %v95 = vld [vmem:[%s2 + $0x8] sm:$0xf]
    %v96 = vld [vmem:[%s2 + $0xc] sm:$0xf]
    %v97 = vld [vmem:[%s2 + $0x10] sm:$0xf]
    %v98 = vld [vmem:[%s2 + $0x14] sm:$0xf]
    %v99 = vld [vmem:[%s2 + $0x18] sm:$0x1]
    %v107 = vunpack.c.l.b16 %v93
    %v108 = vunpack.c.l.b16 %v94
    %v109 = vunpack.c.l.b16 %v95
    %v110 = vunpack.c.l.b16 %v96
    %v111 = vunpack.c.l.b16 %v97
    %v112 = vunpack.c.l.b16 %v98
    %v113 = vunpack.c.l.b16 %v99
    %v114 = vpack.c.b16 %v108, %v107
    %v115 = vpack.c.b16 %v110, %v109
    %v116 = vpack.c.b16 %v112, %v111
    %v117 = vpack.c.b16 %v113, %v113
    %vm121 = vcmask 408576
    %v123 = vsel %vm121, %v89, 0
    %v126 = vsel %vm121, %v90, 0
    %v129 = vsel %vm121, %v91, 0
    %v132 = vsel %vm121, %v92, 0
    %vm134 = vcmask 1040384
    %v136 = vsel %vm134, %v117, 0
    %138 = vmatpush.bf16.msra.mxu0 0
    %139 = vmatpush.bf16.msra.mxu0 0
    %140 = vmatpush.bf16.msra.mxu0 0
    %141 = vmatpush.bf16.msra.mxu0 0
    %142 = vmatpush.bf16.msra.mxu0 %v136
    %143 = vmatpush.bf16.msra.mxu0 %v116
    %144 = vmatpush.bf16.msra.mxu0 %v115
    %145 = vmatpush.bf16.msra.mxu0 %v114
    %146 = vmatmul.bf16.gmra.mxu0 %v123
    %v147 = vpop.f32.mrf.mxu0
    %v148 = vadd.f32 0.0, %v147
    %v149 = vpop.f32.mrf.mxu0
    %v150 = vadd.f32 0.0, %v149
    %151 = vmatmul.bf16.gmra.mxu0 %v126
    %v152 = vpop.f32.mrf.mxu0
    %v153 = vadd.f32 0.0, %v152
    %v154 = vpop.f32.mrf.mxu0
    %v155 = vadd.f32 0.0, %v154
    %156 = vmatmul.bf16.gmra.mxu0 %v129
    %v157 = vpop.f32.mrf.mxu0
    %v158 = vadd.f32 0.0, %v157
    %v159 = vpop.f32.mrf.mxu0
    %v160 = vadd.f32 0.0, %v159
    %161 = vmatmul.bf16.gmra.mxu0 %v132
    %v162 = vpop.f32.mrf.mxu0
    %v163 = vadd.f32 0.0, %v162
    %v164 = vpop.f32.mrf.mxu0
    %v165 = vadd.f32 0.0, %v164
    %166 = vdwg.mxu0
    %v167 = vpack.c.bf16 %v150, %v148
    %v168 = vpack.c.bf16 %v155, %v153
    %v169 = vpack.c.bf16 %v160, %v158
    %v170 = vpack.c.bf16 %v165, %v163
    %v171 = vld [vmem:[%s3] sm:$0xf]
    %v172 = vld [vmem:[%s3 + $0x4] sm:$0xf]
    %v173 = vld [vmem:[%s3 + $0x8] sm:$0xf]
    %v174 = vld [vmem:[%s3 + $0xc] sm:$0xf]
    %v175 = vld [vmem:[%s5] sm:$0x1]
    %v177 = vperm.slane %v175, 0
    %v183 = vunpack.c.l.b16 %v171
    %v184 = vunpack.c.l.b16 %v172
    %v185 = vunpack.c.l.b16 %v173
    %v186 = vunpack.c.l.b16 %v174
    %v187 = vpack.c.b16 %v184, %v183
    %v188 = vpack.c.b16 %v186, %v185
    %vm191 = vcmask 261120
    %v193 = vsel %vm191, %v167, 0
    %v196 = vsel %vm191, %v168, 0
    %v199 = vsel %vm191, %v169, 0
    %v202 = vsel %vm191, %v170, 0
    %204 = vmatpush.bf16.msra.mxu0 0
    %205 = vmatpush.bf16.msra.mxu0 0
    %206 = vmatpush.bf16.msra.mxu0 0
    %207 = vmatpush.bf16.msra.mxu0 0
    %208 = vmatpush.bf16.msra.mxu0 0
    %209 = vmatpush.bf16.msra.mxu0 0
    %210 = vmatpush.bf16.msra.mxu0 %v188
    %211 = vmatpush.bf16.msra.mxu0 %v187
    %212 = vmatmul.bf16.gmra.mxu0 %v193
    %v213 = vpop.f32.mrf.mxu0
    %v214 = vadd.f32 %v177, %v213
    %v215 = vpop.f32.mrf.mxu0
    %v216 = vadd.f32 %v177, %v215
    %217 = vmatmul.bf16.gmra.mxu0 %v196
    %v218 = vpop.f32.mrf.mxu0
    %v219 = vadd.f32 %v177, %v218
    %v220 = vpop.f32.mrf.mxu0
    %v221 = vadd.f32 %v177, %v220
    %222 = vmatmul.bf16.gmra.mxu0 %v199
    %v223 = vpop.f32.mrf.mxu0
    %v224 = vadd.f32 %v177, %v223
    %v225 = vpop.f32.mrf.mxu0
    %v226 = vadd.f32 %v177, %v225
    %227 = vmatmul.bf16.gmra.mxu0 %v202
    %v228 = vpop.f32.mrf.mxu0
    %v229 = vadd.f32 %v177, %v228
    %v230 = vpop.f32.mrf.mxu0
    %v231 = vadd.f32 %v177, %v230
    %232 = vdwg.mxu0
    %v233 = vld [vmem:[%s4] sm:$0xf]
    %v234 = vld [vmem:[%s4 + $0x4] sm:$0xf]
    %v235 = vld [vmem:[%s4 + $0x8] sm:$0xf]
    %v236 = vld [vmem:[%s4 + $0xc] sm:$0xf]
    %v237 = vld [vmem:[%s1] sm:$0xff]
    %v242 = vunpack.c.l.b16 %v233
    %v243 = vunpack.c.l.b16 %v234
    %v244 = vunpack.c.l.b16 %v235
    %v245 = vunpack.c.l.b16 %v236
    %v246 = vpack.c.b16 %v243, %v242
    %v247 = vpack.c.b16 %v245, %v244
    %v251 = vsel %vm191, 0, 0
    %253 = vmatpush.bf16.msra.mxu0 0
    %254 = vmatpush.bf16.msra.mxu0 0
    %255 = vmatpush.bf16.msra.mxu0 0
    %256 = vmatpush.bf16.msra.mxu0 0
    %257 = vmatpush.bf16.msra.mxu0 0
    %258 = vmatpush.bf16.msra.mxu0 0
    %259 = vmatpush.bf16.msra.mxu0 %v247
    %260 = vmatpush.bf16.msra.mxu0 %v246
    %261 = vmatmul.bf16.gmra.mxu0 %v251
    %v262 = vpop.f32.mrf.mxu0
    %v263 = vadd.f32 0.0, %v262
    %v264 = vpop.f32.mrf.mxu0
    %265 = vdwg.mxu0
    %v266 = vadd.f32 %v214, %v263
    %v267 = vxor.u32 %v266, 2147483648
    %v268 = vmul.f32 %v267, 1.442695
    %v269 = vpow.pop %v268
    %v270 = vadd.f32 %v269, 1.0
    %v271 = vrcp.pop %v270
    %v272 = vmul.f32 %v270, %v271
    %v273 = vsub.f32 1.0, %v272
    %v274 = vmul.f32 %v271, %v273
    %v275 = vadd.f32 %v271, %v274
    %vm276 = vweird.f32 %v270
    %vm277 = vweird.f32 %v271
    %vm278 = vmor %vm276, %vm277
    %v279 = vsel %vm278, %v271, %v275
    %v280 = vand.u32 2147483647, %v270
    %vm281 = vcmp.eq.f32.partialorder %v280, 8.507059e+37
    %v282 = vand.u32 %v270, 2147483648
    %v283 = vor.u32 1.1754944e-38, %v282
    %v284 = vsel %vm281, %v283, %v279
    %v285 = vmul.f32 1.0, %v284
    %v286 = vtanh.pop %v266
    %v287 = vmul.f32 %v285, 0.0
    %289 = vrot.lane.b32.xlu0 %v286, 64
    %v290 = vpop.permute.xlu0 %289
    %v292 = vmul.f32 %v285, %v290
    %294 = vrot.lane.b32.xlu0 %v292, 32
    %v295 = vpop.permute.xlu0 %294
    %v297 = vadd.f32 %v287, %v295
    %v298 = vtanh.pop %v297
    %300 = vrot.lane.b32.xlu0 %v298, 64
    %v301 = vpop.permute.xlu0 %300
    %v303 = vmul.f32 %v285, %v301
    %vm304 = vcmp.gt.s32.totalorder %v237, 0
    %v305 = vsel %vm304, 1, 0
    %306 = vset.pattern.permute.xlu0 0
    %307 = vperm.xlu0 %306, %v305
    %v308 = vpop.permute.xlu0 %307
    %vm309 = vcmp.eq.s32.totalorder %v308, 1
    %v310 = vsel %vm309, %v303, 0.0
    %v311 = vsel %vm309, %v297, 0.0
    %v312 = vpack.c.bf16 %v310, %v310
    %314 = vrot.lane.b32.xlu0 %v312, 32
    %v315 = vpop.permute.xlu0 %314
    %v317 = vsel %vm191, %v315, 0
    %319 = vmatpush.bf16.msra.mxu0 0
    %320 = vmatpush.bf16.msra.mxu0 0
    %321 = vmatpush.bf16.msra.mxu0 0
    %322 = vmatpush.bf16.msra.mxu0 0
    %323 = vmatpush.bf16.msra.mxu0 0
    %324 = vmatpush.bf16.msra.mxu0 0
    %325 = vmatpush.bf16.msra.mxu0 %v247
    %326 = vmatpush.bf16.msra.mxu0 %v246
    %327 = vmatmul.bf16.gmra.mxu0 %v317
    %v328 = vpop.f32.mrf.mxu0
    %v329 = vadd.f32 0.0, %v328
    %v330 = vpop.f32.mrf.mxu0
    %331 = vdwg.mxu0
    %v332 = vadd.f32 %v216, %v329
    %v333 = vxor.u32 %v332, 2147483648
    %v334 = vmul.f32 %v333, 1.442695
    %v335 = vpow.pop %v334
    %v336 = vadd.f32 %v335, 1.0
    %v337 = vrcp.pop %v336
    %v338 = vmul.f32 %v336, %v337
    %v339 = vsub.f32 1.0, %v338
    %v340 = vmul.f32 %v337, %v339
    %v341 = vadd.f32 %v337, %v340
    %vm342 = vweird.f32 %v336
    %vm343 = vweird.f32 %v337
    %vm344 = vmor %vm342, %vm343
    %v345 = vsel %vm344, %v337, %v341
    %v346 = vand.u32 2147483647, %v336
    %vm347 = vcmp.eq.f32.partialorder %v346, 8.507059e+37
    %v348 = vand.u32 %v336, 2147483648
    %v349 = vor.u32 1.1754944e-38, %v348
    %v350 = vsel %vm347, %v349, %v345
    %v351 = vmul.f32 1.0, %v350
    %v352 = vtanh.pop %v332
    %v353 = vmul.f32 %v351, %v311
    %355 = vrot.lane.b32.xlu0 %v352, 64
    %v356 = vpop.permute.xlu0 %355
    %v358 = vmul.f32 %v351, %v356
    %360 = vrot.lane.b32.xlu0 %v358, 32
    %v361 = vpop.permute.xlu0 %360
    %v363 = vadd.f32 %v353, %v361
    %v364 = vtanh.pop %v363
    %366 = vrot.lane.b32.xlu0 %v364, 64
    %v367 = vpop.permute.xlu0 %366
    %v369 = vmul.f32 %v351, %v367
    %vm370 = vcmp.gt.s32.totalorder %v237, 1
    %v371 = vsel %vm370, 1, 0
    %372 = vset.pattern.permute.xlu0 0
    %373 = vperm.xlu0 %372, %v371
    %v374 = vpop.permute.xlu0 %373
    %vm375 = vcmp.eq.s32.totalorder %v374, 1
    %v376 = vsel %vm375, %v369, %v310
    %v377 = vsel %vm375, %v363, %v311
    %v378 = vpack.c.bf16 %v376, %v376
    %380 = vrot.lane.b32.xlu0 %v378, 32
    %v381 = vpop.permute.xlu0 %380
    %v383 = vsel %vm191, %v381, 0
    %385 = vmatpush.bf16.msra.mxu0 0
    %386 = vmatpush.bf16.msra.mxu0 0
    %387 = vmatpush.bf16.msra.mxu0 0
    %388 = vmatpush.bf16.msra.mxu0 0
    %389 = vmatpush.bf16.msra.mxu0 0
    %390 = vmatpush.bf16.msra.mxu0 0
    %391 = vmatpush.bf16.msra.mxu0 %v247
    %392 = vmatpush.bf16.msra.mxu0 %v246
    %393 = vmatmul.bf16.gmra.mxu0 %v383
    %v394 = vpop.f32.mrf.mxu0
    %v395 = vadd.f32 0.0, %v394
    %v396 = vpop.f32.mrf.mxu0
    %397 = vdwg.mxu0
    %v398 = vadd.f32 %v219, %v395
    %v399 = vxor.u32 %v398, 2147483648
    %v400 = vmul.f32 %v399, 1.442695
    %v401 = vpow.pop %v400
    %v402 = vadd.f32 %v401, 1.0
    %v403 = vrcp.pop %v402
    %v404 = vmul.f32 %v402, %v403
    %v405 = vsub.f32 1.0, %v404
    %v406 = vmul.f32 %v403, %v405
    %v407 = vadd.f32 %v403, %v406
    %vm408 = vweird.f32 %v402
    %vm409 = vweird.f32 %v403
    %vm410 = vmor %vm408, %vm409
    %v411 = vsel %vm410, %v403, %v407
    %v412 = vand.u32 2147483647, %v402
    %vm413 = vcmp.eq.f32.partialorder %v412, 8.507059e+37
    %v414 = vand.u32 %v402, 2147483648
    %v415 = vor.u32 1.1754944e-38, %v414
    %v416 = vsel %vm413, %v415, %v411
    %v417 = vmul.f32 1.0, %v416
    %v418 = vtanh.pop %v398
    %v419 = vmul.f32 %v417, %v377
    %421 = vrot.lane.b32.xlu0 %v418, 64
    %v422 = vpop.permute.xlu0 %421
    %v424 = vmul.f32 %v417, %v422
    %426 = vrot.lane.b32.xlu0 %v424, 32
    %v427 = vpop.permute.xlu0 %426
    %v429 = vadd.f32 %v419, %v427
    %v430 = vtanh.pop %v429
    %432 = vrot.lane.b32.xlu0 %v430, 64
    %v433 = vpop.permute.xlu0 %432
    %v435 = vmul.f32 %v417, %v433
    %vm436 = vcmp.gt.s32.totalorder %v237, 2
    %v437 = vsel %vm436, 1, 0
    %438 = vset.pattern.permute.xlu0 0
    %439 = vperm.xlu0 %438, %v437
    %v440 = vpop.permute.xlu0 %439
    %vm441 = vcmp.eq.s32.totalorder %v440, 1
    %v442 = vsel %vm441, %v435, %v376
    %v443 = vsel %vm441, %v429, %v377
    %v444 = vpack.c.bf16 %v442, %v442
    %446 = vrot.lane.b32.xlu0 %v444, 32
    %v447 = vpop.permute.xlu0 %446
    %v449 = vsel %vm191, %v447, 0
    %451 = vmatpush.bf16.msra.mxu0 0
    %452 = vmatpush.bf16.msra.mxu0 0
    %453 = vmatpush.bf16.msra.mxu0 0
    %454 = vmatpush.bf16.msra.mxu0 0
    %455 = vmatpush.bf16.msra.mxu0 0
    %456 = vmatpush.bf16.msra.mxu0 0
    %457 = vmatpush.bf16.msra.mxu0 %v247
    %458 = vmatpush.bf16.msra.mxu0 %v246
    %459 = vmatmul.bf16.gmra.mxu0 %v449
    %v460 = vpop.f32.mrf.mxu0
    %v461 = vadd.f32 0.0, %v460
    %v462 = vpop.f32.mrf.mxu0
    %463 = vdwg.mxu0
    %v464 = vadd.f32 %v221, %v461
    %v465 = vxor.u32 %v464, 2147483648
    %v466 = vmul.f32 %v465, 1.442695
    %v467 = vpow.pop %v466
    %v468 = vadd.f32 %v467, 1.0
    %v469 = vrcp.pop %v468
    %v470 = vmul.f32 %v468, %v469
    %v471 = vsub.f32 1.0, %v470
    %v472 = vmul.f32 %v469, %v471
    %v473 = vadd.f32 %v469, %v472
    %vm474 = vweird.f32 %v468
    %vm475 = vweird.f32 %v469
    %vm476 = vmor %vm474, %vm475
    %v477 = vsel %vm476, %v469, %v473
    %v478 = vand.u32 2147483647, %v468
    %vm479 = vcmp.eq.f32.partialorder %v478, 8.507059e+37
    %v480 = vand.u32 %v468, 2147483648
    %v481 = vor.u32 1.1754944e-38, %v480
    %v482 = vsel %vm479, %v481, %v477
    %v483 = vmul.f32 1.0, %v482
    %v484 = vtanh.pop %v464
    %v485 = vmul.f32 %v483, %v443
    %487 = vrot.lane.b32.xlu0 %v484, 64
    %v488 = vpop.permute.xlu0 %487
    %v490 = vmul.f32 %v483, %v488
    %492 = vrot.lane.b32.xlu0 %v490, 32
    %v493 = vpop.permute.xlu0 %492
    %v495 = vadd.f32 %v485, %v493
    %v496 = vtanh.pop %v495
    %498 = vrot.lane.b32.xlu0 %v496, 64
    %v499 = vpop.permute.xlu0 %498
    %v501 = vmul.f32 %v483, %v499
    %vm502 = vcmp.gt.s32.totalorder %v237, 3
    %v503 = vsel %vm502, 1, 0
    %504 = vset.pattern.permute.xlu0 0
    %505 = vperm.xlu0 %504, %v503
    %v506 = vpop.permute.xlu0 %505
    %vm507 = vcmp.eq.s32.totalorder %v506, 1
    %v508 = vsel %vm507, %v501, %v442
    %v509 = vsel %vm507, %v495, %v443
    %v510 = vpack.c.bf16 %v508, %v508
    %512 = vrot.lane.b32.xlu0 %v510, 32
    %v513 = vpop.permute.xlu0 %512
    %v515 = vsel %vm191, %v513, 0
    %517 = vmatpush.bf16.msra.mxu0 0
    %518 = vmatpush.bf16.msra.mxu0 0
    %519 = vmatpush.bf16.msra.mxu0 0
    %520 = vmatpush.bf16.msra.mxu0 0
    %521 = vmatpush.bf16.msra.mxu0 0
    %522 = vmatpush.bf16.msra.mxu0 0
    %523 = vmatpush.bf16.msra.mxu0 %v247
    %524 = vmatpush.bf16.msra.mxu0 %v246
    %525 = vmatmul.bf16.gmra.mxu0 %v515
    %v526 = vpop.f32.mrf.mxu0
    %v527 = vadd.f32 0.0, %v526
    %v528 = vpop.f32.mrf.mxu0
    %529 = vdwg.mxu0
    %v530 = vadd.f32 %v224, %v527
    %v531 = vxor.u32 %v530, 2147483648
    %v532 = vmul.f32 %v531, 1.442695
    %v533 = vpow.pop %v532
    %v534 = vadd.f32 %v533, 1.0
    %v535 = vrcp.pop %v534
    %v536 = vmul.f32 %v534, %v535
    %v537 = vsub.f32 1.0, %v536
    %v538 = vmul.f32 %v535, %v537
    %v539 = vadd.f32 %v535, %v538
    %vm540 = vweird.f32 %v534
    %vm541 = vweird.f32 %v535
    %vm542 = vmor %vm540, %vm541
    %v543 = vsel %vm542, %v535, %v539
    %v544 = vand.u32 2147483647, %v534
    %vm545 = vcmp.eq.f32.partialorder %v544, 8.507059e+37
    %v546 = vand.u32 %v534, 2147483648
    %v547 = vor.u32 1.1754944e-38, %v546
    %v548 = vsel %vm545, %v547, %v543
    %v549 = vmul.f32 1.0, %v548
    %v550 = vtanh.pop %v530
    %v551 = vmul.f32 %v549, %v509
    %553 = vrot.lane.b32.xlu0 %v550, 64
    %v554 = vpop.permute.xlu0 %553
    %v556 = vmul.f32 %v549, %v554
    %558 = vrot.lane.b32.xlu0 %v556, 32
    %v559 = vpop.permute.xlu0 %558
    %v561 = vadd.f32 %v551, %v559
    %v562 = vtanh.pop %v561
    %564 = vrot.lane.b32.xlu0 %v562, 64
    %v565 = vpop.permute.xlu0 %564
    %v567 = vmul.f32 %v549, %v565
    %vm568 = vcmp.gt.s32.totalorder %v237, 4
    %v569 = vsel %vm568, 1, 0
    %570 = vset.pattern.permute.xlu0 0
    %571 = vperm.xlu0 %570, %v569
    %v572 = vpop.permute.xlu0 %571
    %vm573 = vcmp.eq.s32.totalorder %v572, 1
    %v574 = vsel %vm573, %v567, %v508
    %v575 = vsel %vm573, %v561, %v509
    %v576 = vpack.c.bf16 %v574, %v574
    %578 = vrot.lane.b32.xlu0 %v576, 32
    %v579 = vpop.permute.xlu0 %578
    %v581 = vsel %vm191, %v579, 0
    %583 = vmatpush.bf16.msra.mxu0 0
    %584 = vmatpush.bf16.msra.mxu0 0
    %585 = vmatpush.bf16.msra.mxu0 0
    %586 = vmatpush.bf16.msra.mxu0 0
    %587 = vmatpush.bf16.msra.mxu0 0
    %588 = vmatpush.bf16.msra.mxu0 0
    %589 = vmatpush.bf16.msra.mxu0 %v247
    %590 = vmatpush.bf16.msra.mxu0 %v246
    %591 = vmatmul.bf16.gmra.mxu0 %v581
    %v592 = vpop.f32.mrf.mxu0
    %v593 = vadd.f32 0.0, %v592
    %v594 = vpop.f32.mrf.mxu0
    %595 = vdwg.mxu0
    %v596 = vadd.f32 %v226, %v593
    %v597 = vxor.u32 %v596, 2147483648
    %v598 = vmul.f32 %v597, 1.442695
    %v599 = vpow.pop %v598
    %v600 = vadd.f32 %v599, 1.0
    %v601 = vrcp.pop %v600
    %v602 = vmul.f32 %v600, %v601
    %v603 = vsub.f32 1.0, %v602
    %v604 = vmul.f32 %v601, %v603
    %v605 = vadd.f32 %v601, %v604
    %vm606 = vweird.f32 %v600
    %vm607 = vweird.f32 %v601
    %vm608 = vmor %vm606, %vm607
    %v609 = vsel %vm608, %v601, %v605
    %v610 = vand.u32 2147483647, %v600
    %vm611 = vcmp.eq.f32.partialorder %v610, 8.507059e+37
    %v612 = vand.u32 %v600, 2147483648
    %v613 = vor.u32 1.1754944e-38, %v612
    %v614 = vsel %vm611, %v613, %v609
    %v615 = vmul.f32 1.0, %v614
    %v616 = vtanh.pop %v596
    %v617 = vmul.f32 %v615, %v575
    %619 = vrot.lane.b32.xlu0 %v616, 64
    %v620 = vpop.permute.xlu0 %619
    %v622 = vmul.f32 %v615, %v620
    %624 = vrot.lane.b32.xlu0 %v622, 32
    %v625 = vpop.permute.xlu0 %624
    %v627 = vadd.f32 %v617, %v625
    %v628 = vtanh.pop %v627
    %630 = vrot.lane.b32.xlu0 %v628, 64
    %v631 = vpop.permute.xlu0 %630
    %v633 = vmul.f32 %v615, %v631
    %vm634 = vcmp.gt.s32.totalorder %v237, 5
    %v635 = vsel %vm634, 1, 0
    %636 = vset.pattern.permute.xlu0 0
    %637 = vperm.xlu0 %636, %v635
    %v638 = vpop.permute.xlu0 %637
    %vm639 = vcmp.eq.s32.totalorder %v638, 1
    %v640 = vsel %vm639, %v633, %v574
    %v641 = vsel %vm639, %v627, %v575
    %v642 = vpack.c.bf16 %v640, %v640
    %644 = vrot.lane.b32.xlu0 %v642, 32
    %v645 = vpop.permute.xlu0 %644
    %v647 = vsel %vm191, %v645, 0
    %649 = vmatpush.bf16.msra.mxu0 0
    %650 = vmatpush.bf16.msra.mxu0 0
    %651 = vmatpush.bf16.msra.mxu0 0
    %652 = vmatpush.bf16.msra.mxu0 0
    %653 = vmatpush.bf16.msra.mxu0 0
    %654 = vmatpush.bf16.msra.mxu0 0
    %655 = vmatpush.bf16.msra.mxu0 %v247
    %656 = vmatpush.bf16.msra.mxu0 %v246
    %657 = vmatmul.bf16.gmra.mxu0 %v647
    %v658 = vpop.f32.mrf.mxu0
    %v659 = vadd.f32 0.0, %v658
    %v660 = vpop.f32.mrf.mxu0
    %661 = vdwg.mxu0
    %v662 = vadd.f32 %v229, %v659
    %v663 = vxor.u32 %v662, 2147483648
    %v664 = vmul.f32 %v663, 1.442695
    %v665 = vpow.pop %v664
    %v666 = vadd.f32 %v665, 1.0
    %v667 = vrcp.pop %v666
    %v668 = vmul.f32 %v666, %v667
    %v669 = vsub.f32 1.0, %v668
    %v670 = vmul.f32 %v667, %v669
    %v671 = vadd.f32 %v667, %v670
    %vm672 = vweird.f32 %v666
    %vm673 = vweird.f32 %v667
    %vm674 = vmor %vm672, %vm673
    %v675 = vsel %vm674, %v667, %v671
    %v676 = vand.u32 2147483647, %v666
    %vm677 = vcmp.eq.f32.partialorder %v676, 8.507059e+37
    %v678 = vand.u32 %v666, 2147483648
    %v679 = vor.u32 1.1754944e-38, %v678
    %v680 = vsel %vm677, %v679, %v675
    %v681 = vmul.f32 1.0, %v680
    %v682 = vtanh.pop %v662
    %v683 = vmul.f32 %v681, %v641
    %685 = vrot.lane.b32.xlu0 %v682, 64
    %v686 = vpop.permute.xlu0 %685
    %v688 = vmul.f32 %v681, %v686
    %690 = vrot.lane.b32.xlu0 %v688, 32
    %v691 = vpop.permute.xlu0 %690
    %v693 = vadd.f32 %v683, %v691
    %v694 = vtanh.pop %v693
    %696 = vrot.lane.b32.xlu0 %v694, 64
    %v697 = vpop.permute.xlu0 %696
    %v699 = vmul.f32 %v681, %v697
    %vm700 = vcmp.gt.s32.totalorder %v237, 6
    %v701 = vsel %vm700, 1, 0
    %702 = vset.pattern.permute.xlu0 0
    %703 = vperm.xlu0 %702, %v701
    %v704 = vpop.permute.xlu0 %703
    %vm705 = vcmp.eq.s32.totalorder %v704, 1
    %v706 = vsel %vm705, %v699, %v640
    %v707 = vsel %vm705, %v693, %v641
    %v708 = vpack.c.bf16 %v706, %v706
    %710 = vrot.lane.b32.xlu0 %v708, 32
    %v711 = vpop.permute.xlu0 %710
    %v713 = vsel %vm191, %v711, 0
    %715 = vmatpush.bf16.msra.mxu0 0
    %716 = vmatpush.bf16.msra.mxu0 0
    %717 = vmatpush.bf16.msra.mxu0 0
    %718 = vmatpush.bf16.msra.mxu0 0
    %719 = vmatpush.bf16.msra.mxu0 0
    %720 = vmatpush.bf16.msra.mxu0 0
    %721 = vmatpush.bf16.msra.mxu0 %v247
    %722 = vmatpush.bf16.msra.mxu0 %v246
    %723 = vmatmul.bf16.gmra.mxu0 %v713
    %v724 = vpop.f32.mrf.mxu0
    %v725 = vadd.f32 0.0, %v724
    %v726 = vpop.f32.mrf.mxu0
    %727 = vdwg.mxu0
    %v728 = vadd.f32 %v231, %v725
    %v729 = vxor.u32 %v728, 2147483648
    %v730 = vmul.f32 %v729, 1.442695
    %v731 = vpow.pop %v730
    %v732 = vadd.f32 %v731, 1.0
    %v733 = vrcp.pop %v732
    %v734 = vmul.f32 %v732, %v733
    %v735 = vsub.f32 1.0, %v734
    %v736 = vmul.f32 %v733, %v735
    %v737 = vadd.f32 %v733, %v736
    %vm738 = vweird.f32 %v732
    %vm739 = vweird.f32 %v733
    %vm740 = vmor %vm738, %vm739
    %v741 = vsel %vm740, %v733, %v737
    %v742 = vand.u32 2147483647, %v732
    %vm743 = vcmp.eq.f32.partialorder %v742, 8.507059e+37
    %v744 = vand.u32 %v732, 2147483648
    %v745 = vor.u32 1.1754944e-38, %v744
    %v746 = vsel %vm743, %v745, %v741
    %v747 = vmul.f32 1.0, %v746
    %v748 = vtanh.pop %v728
    %v749 = vmul.f32 %v747, %v707
    %751 = vrot.lane.b32.xlu0 %v748, 64
    %v752 = vpop.permute.xlu0 %751
    %v754 = vmul.f32 %v747, %v752
    %756 = vrot.lane.b32.xlu0 %v754, 32
    %v757 = vpop.permute.xlu0 %756
    %v759 = vadd.f32 %v749, %v757
    %v760 = vtanh.pop %v759
    %762 = vrot.lane.b32.xlu0 %v760, 64
    %v763 = vpop.permute.xlu0 %762
    %v765 = vmul.f32 %v747, %v763
    %vm766 = vcmp.gt.s32.totalorder %v237, 7
    %v767 = vsel %vm766, 1, 0
    %768 = vset.pattern.permute.xlu0 0
    %769 = vperm.xlu0 %768, %v767
    %v770 = vpop.permute.xlu0 %769
    %vm771 = vcmp.eq.s32.totalorder %v770, 1
    %v772 = vsel %vm771, %v765, %v706
    %v773 = vpack.c.bf16 %v772, %v772
    %v774 = vld [vmem:[%s6] sm:$0xf]
    %v775 = vld [vmem:[%s6 + $0x4] sm:$0xf]
    %v776 = vld [vmem:[%s6 + $0x8] sm:$0xf]
    %v777 = vld [vmem:[%s6 + $0xc] sm:$0xf]
    %v778 = vld [vmem:[%s7] sm:$0x1]
    %v780 = vperm.slane %v778, 0
    %783 = vrot.lane.b32.xlu0 %v773, 32
    %v784 = vpop.permute.xlu0 %783
    %v789 = vunpack.c.l.b16 %v774
    %v790 = vunpack.c.l.b16 %v775
    %v791 = vunpack.c.l.b16 %v776
    %v792 = vunpack.c.l.b16 %v777
    %v793 = vpack.c.b16 %v790, %v789
    %v794 = vpack.c.b16 %v792, %v791
    %v798 = vsel %vm191, %v784, 0
    %800 = vmatpush.bf16.msra.mxu0 0
    %801 = vmatpush.bf16.msra.mxu0 0
    %802 = vmatpush.bf16.msra.mxu0 0
    %803 = vmatpush.bf16.msra.mxu0 0
    %804 = vmatpush.bf16.msra.mxu0 0
    %805 = vmatpush.bf16.msra.mxu0 0
    %806 = vmatpush.bf16.msra.mxu0 %v794
    %807 = vmatpush.bf16.msra.mxu0 %v793
    %808 = vmatmul.bf16.gmra.mxu0 %v798
    %v809 = vpop.f32.mrf.mxu0
    %v810 = vadd.f32 %v780, %v809
    %v811 = vpop.f32.mrf.mxu0
    %812 = vdwg.mxu0
    %813 = vst [vmem:[#allocation2] sm:$0xff] %v810
    // Predicated region
    $region34: #{tpu_custom_call.1} parent=1 // pred_check
      _
    $region35: #{tpu_custom_call.1} parent=1 // pred_check_branch
      %815 = sbr.rel (0) target = $region37
    $region36: #{tpu_custom_call.1} parent=1 // pred_region
      %817 = vsyncadd [#allocation3], 0
      %s819 = sshll.u32 [#allocation2], 4
      %s820 = int_to_ptr.vmem [resolvable:$true] %s819
      %s821 = sshll.u32 %s8, 4
      %s822 = int_to_ptr.hbm [resolvable:$true] %s821
      %824 = dma.vmem_to_hbm [thread:$0]  %s820, 128, %s822, [#allocation3]
    $region37: #{tpu_custom_call.1} parent=1 // pred_fallthru
      _
    // Predicated region
    $region38: #{tpu_custom_call.1} parent=1 // pred_check
      _
    $region39: #{tpu_custom_call.1} parent=1 // pred_check_branch
      %826 = sbr.rel (0) target = $region41
    $region40: #{tpu_custom_call.1} parent=1 // pred_region
      %828 = dma.done [#allocation3], 128
    $region41: #{tpu_custom_call.1} parent=1 // pred_fallthru
      _
    %829 = vsyncpa [#allocation3], 1

</llo_original>
